<compile_context>
chip_gen: v6e
topology: v6e:2x2x1
jax: 0.10.0
libtpu: 0.0.40
codegen_flags: <defaults>
</compile_context>

<pallas_src>
import functools

import jax
import jax.numpy as jnp
from jax.experimental import pallas as pl
from jax.experimental.pallas import tpu as pltpu


_LANE = 128
_SUBLANE = 8
_TILE_B_DEFAULT = 1024   # rows per grid step (~2 MiB VMEM/step incl. double buffers)


def _round_up(x, m):
    return ((x + m - 1) // m) * m


def _cdiv(a, b):
    return (a + b - 1) // b


def _policy_mlp_kernel(x_ref, w1_ref, b1_ref, w2_ref, b2_ref, probs_ref, *, d_out):
    """Fused policy MLP head on one batch tile.

    h      = tanh(x @ W1 + b1)   (MXU bf16 inputs, f32 accumulate; tanh on EUP in f32)
    logits = h @ W2 + b2         (padded output lanes carry a -1e30 bias from prep)
    probs  = softmax(logits)     (exact f32 division; only the real lanes are stored)
    """
    x = x_ref[...].astype(jnp.bfloat16)                 # in-kernel cast: free under mem-bound
    h = jnp.dot(x, w1_ref[...], preferred_element_type=jnp.float32) + b1_ref[...]
    h = jnp.tanh(h)                                     # f32 (v5e has no bf16 VPU/EUP)
    logits = jnp.dot(h.astype(jnp.bfloat16), w2_ref[...],
                     preferred_element_type=jnp.float32) + b2_ref[...]

    # Numerically stable softmax. Padded lanes already sit at ~-1e30 via the b2
    # prep, so no per-tile iota/where mask is needed and their exp() is exactly 0.
    m = jnp.max(logits, axis=-1, keepdims=True)
    e = jnp.exp(logits - m)
    denom = jnp.sum(e, axis=-1, keepdims=True)
    probs = e / denom                                   # exact division (downstream log-prob/KL)

    # Store only the real action lanes -> HBM writeback is B * D_out * 4 bytes.
    probs_ref[...] = probs[:, :d_out].astype(probs_ref.dtype)


def pg_policy_prepare_params(w1, b1, w2, b2):
    """One-time weight prep (call at policy construction, NOT per forward).

    Pads hidden & output dims to a full 128-lane width for the MXU (zero padding
    is exact: padded hidden units are tanh(0)=0 and padded W2 rows are zero),
    casts the MXU operands to bf16, and folds the softmax lane mask into b2
    (padded output lanes get a -1e30 bias so exp() underflows to exactly 0).
    """
    d_in, h = w1.shape
    d_out = w2.shape[1]
    h_pad = _round_up(max(h, _LANE), _LANE)
    o_pad = _round_up(max(d_out, _LANE), _LANE)

    w1p = jnp.pad(w1, ((0, 0), (0, h_pad - h))).astype(jnp.bfloat16)
    b1p = jnp.pad(jnp.asarray(b1, jnp.float32).reshape(1, -1),
                  ((0, 0), (0, h_pad - h)))
    w2p = jnp.pad(w2, ((0, h_pad - h), (0, o_pad - d_out))).astype(jnp.bfloat16)
    b2p = jnp.pad(jnp.asarray(b2, jnp.float32).reshape(1, -1),
                  ((0, 0), (0, o_pad - d_out)),
                  constant_values=-1e30)                 # softmax lane mask folded in

    return dict(w1=w1p, b1=b1p, w2=w2p, b2=b2p,
                d_in=d_in, h_pad=h_pad, o_pad=o_pad, d_out=d_out)


def pg_policy_forward(x, params):
    """Runs the fused policy MLP as a batch-tiled Pallas call.

    Args:
      x: [B, D_in] float32 observations (read as f32, cast to bf16 in-kernel).
      params: output of pg_policy_prepare_params (prepared once).

    Returns:
      probs: [B, D_out] float32 action probabilities (softmax over logits).
    """
    B, D_in = x.shape
    assert D_in == params["d_in"]
    d_out, h_pad, o_pad = params["d_out"], params["h_pad"], params["o_pad"]
    w1p, b1p, w2p, b2p = params["w1"], params["b1"], params["w2"], params["b2"]

    # Batch tiling: no batch padding, no post-kernel slice -- Pallas handles an
    # uneven last block (OOB rows never reach HBM). Use >=2 grid steps whenever
    # B allows, so the "parallel" axis shards across both TensorCores on v7x.
    tile_b = min(_TILE_B_DEFAULT, _round_up(B, _SUBLANE))
    if _cdiv(B, tile_b) < 2 and B >= 2 * _SUBLANE:
        tile_b = _round_up(_cdiv(B, 2), _SUBLANE)
    grid = (_cdiv(B, tile_b),)

    # Scheduler hint for XLA around the custom call.
    flops = 2 * B * (D_in * h_pad + h_pad * o_pad)
    transcendentals = B * (h_pad + o_pad)                 # tanh + exp
    bytes_accessed = (x.size * 4 + w1p.size * 2 + w2p.size * 2
                      + b1p.size * 4 + b2p.size * 4 + B * d_out * 4)

    probs = pl.pallas_call(
        functools.partial(_policy_mlp_kernel, d_out=d_out),
        out_shape=jax.ShapeDtypeStruct((B, d_out), jnp.float32),
        grid_spec=pl.GridSpec(
            grid=grid,
            in_specs=[
                pl.BlockSpec((tile_b, D_in), lambda i: (i, 0)),   # x      (tiled over batch)
                pl.BlockSpec((D_in, h_pad), lambda i: (0, 0)),    # W1     (resident)
                pl.BlockSpec((1, h_pad), lambda i: (0, 0)),       # b1     (resident)
                pl.BlockSpec((h_pad, o_pad), lambda i: (0, 0)),   # W2     (resident)
                pl.BlockSpec((1, o_pad), lambda i: (0, 0)),       # b2+mask(resident)
            ],
            out_specs=pl.BlockSpec((tile_b, d_out), lambda i: (i, 0)),  # dense, unpadded
        ),
        compiler_params=pltpu.CompilerParams(
            dimension_semantics=("parallel",)),
        cost_estimate=pl.CostEstimate(
            flops=flops,
            transcendentals=transcendentals,
            bytes_accessed=bytes_accessed),
    )(x, w1p, b1p, w2p, b2p)

    return probs


def _reference_forward(x, w1, b1, w2, b2):
    h = jnp.tanh(x @ w1 + b1)
    logits = h @ w2 + b2
    return jax.nn.softmax(logits, axis=-1)


if __name__ == "__main__":
    key = jax.random.PRNGKey(0)
    k_x, k_w1, k_b1, k_w2, k_b2 = jax.random.split(key, 5)

    # Small shapes consistent with a PG policy over a flat observation:
    # batch=8, input_dim=32, hidden=32, output_dim=8 discrete actions.
    B, D_in, H, D_out = 8, 32, 32, 8

    x = jax.random.normal(k_x, (B, D_in), dtype=jnp.float32)
    w1 = 0.1 * jax.random.normal(k_w1, (D_in, H), dtype=jnp.float32)
    b1 = 0.1 * jax.random.normal(k_b1, (1, H), dtype=jnp.float32)
    w2 = 0.1 * jax.random.normal(k_w2, (H, D_out), dtype=jnp.float32)
    b2 = 0.1 * jax.random.normal(k_b2, (1, D_out), dtype=jnp.float32)

    # One-time weight prep (policy construction time).
    params = pg_policy_prepare_params(w1, b1, w2, b2)
    jax.block_until_ready(params)

    probs = pg_policy_forward(x, params)
    jax.block_until_ready(probs)

    ref_probs = _reference_forward(x, w1, b1, w2, b2)
    assert probs.shape == (B, D_out)
    # bf16 MXU inputs bound logits accuracy to ~1e-2 => relaxed prob tolerance;
    # softmax division is exact f32, so rows sum to 1 to f32 rounding.
    assert jnp.allclose(probs, ref_probs, atol=5e-3, rtol=5e-2)
    assert jnp.allclose(jnp.sum(probs, axis=-1), 1.0, atol=1e-5)

    print("KERNEL_OK")
</pallas_src>

<mosaic_0001>
module attributes {stable_mosaic.version = 11 : i64} {
  func.func @_policy_mlp_kernel(%arg0: i32, %arg1: memref<8x32xf32, #tpu.memory_space<vmem>>, %arg2: memref<32x128xbf16, #tpu.memory_space<vmem>>, %arg3: memref<1x128xf32, #tpu.memory_space<vmem>>, %arg4: memref<128x128xbf16, #tpu.memory_space<vmem>>, %arg5: memref<1x128xf32, #tpu.memory_space<vmem>>, %arg6: memref<8x8xf32, #tpu.memory_space<vmem>>) attributes {dimension_semantics = [#tpu.dimension_semantics<parallel>], iteration_bounds = array<i64: 1>, scalar_prefetch = 0 : i64, scratch_operands = 0 : i64, tpu.core_type = #tpu.core_type<tc>, window_params = [{transform_indices = @transform_0, window_bounds = array<i64: 8, 32>}, {pipeline_mode = #tpu.pipeline_mode<synchronous>, transform_indices = @transform_1, window_bounds = array<i64: 32, 128>}, {pipeline_mode = #tpu.pipeline_mode<synchronous>, transform_indices = @transform_2, window_bounds = array<i64: 1, 128>}, {pipeline_mode = #tpu.pipeline_mode<synchronous>, transform_indices = @transform_3, window_bounds = array<i64: 128, 128>}, {pipeline_mode = #tpu.pipeline_mode<synchronous>, transform_indices = @transform_4, window_bounds = array<i64: 1, 128>}, {transform_indices = @transform_5, window_bounds = array<i64: 8, 8>}]} {
    %c0 = arith.constant 0 : index
    %c0_0 = arith.constant 0 : index
    %0 = vector.load %arg1[%c0, %c0_0] : memref<8x32xf32, #tpu.memory_space<vmem>>, vector<8x32xf32>
    %1 = arith.truncf %0 : vector<8x32xf32> to vector<8x32xbf16>
    %c0_1 = arith.constant 0 : index
    %c0_2 = arith.constant 0 : index
    %2 = vector.load %arg2[%c0_1, %c0_2] : memref<32x128xbf16, #tpu.memory_space<vmem>>, vector<32x128xbf16>
    %cst = arith.constant dense<0.000000e+00> : vector<8x128xf32>
    %3 = tpu.matmul %1, %2, %cst {dimension_numbers = #tpu.dot_dimension_numbers<[1], [0], [0], [1], [0, 0, 1, 1], [], []>} : vector<8x32xbf16>, vector<32x128xbf16>, vector<8x128xf32> -> vector<8x128xf32>
    %c0_3 = arith.constant 0 : index
    %c0_4 = arith.constant 0 : index
    %4 = vector.load %arg3[%c0_3, %c0_4] : memref<1x128xf32, #tpu.memory_space<vmem>>, vector<1x128xf32>
    %5 = vector.broadcast %4 : vector<1x128xf32> to vector<8x128xf32>
    %6 = arith.addf %3, %5 : vector<8x128xf32>
    %7 = math.tanh %6 : vector<8x128xf32>
    %8 = arith.truncf %7 : vector<8x128xf32> to vector<8x128xbf16>
    %c0_5 = arith.constant 0 : index
    %c0_6 = arith.constant 0 : index
    %9 = vector.load %arg4[%c0_5, %c0_6] : memref<128x128xbf16, #tpu.memory_space<vmem>>, vector<128x128xbf16>
    %cst_7 = arith.constant dense<0.000000e+00> : vector<8x128xf32>
    %10 = tpu.matmul %8, %9, %cst_7 {dimension_numbers = #tpu.dot_dimension_numbers<[1], [0], [0], [1], [0, 0, 1, 1], [], []>} : vector<8x128xbf16>, vector<128x128xbf16>, vector<8x128xf32> -> vector<8x128xf32>
    %c0_8 = arith.constant 0 : index
    %c0_9 = arith.constant 0 : index
    %11 = vector.load %arg5[%c0_8, %c0_9] : memref<1x128xf32, #tpu.memory_space<vmem>>, vector<1x128xf32>
    %12 = vector.broadcast %11 : vector<1x128xf32> to vector<8x128xf32>
    %13 = arith.addf %10, %12 : vector<8x128xf32>
    %cst_10 = arith.constant dense<0xFF800000> : vector<8xf32>
    %14 = vector.multi_reduction <maximumf>, %13, %cst_10 [1] : vector<8x128xf32> to vector<8xf32>
    %15 = vector.shape_cast %14 : vector<8xf32> to vector<8x1xf32>
    %16 = vector.broadcast %15 : vector<8x1xf32> to vector<8x128xf32>
    %17 = arith.subf %13, %16 : vector<8x128xf32>
    %18 = math.exp %17 : vector<8x128xf32>
    %cst_11 = arith.constant dense<0.000000e+00> : vector<8xf32>
    %19 = vector.multi_reduction <add>, %18, %cst_11 [1] : vector<8x128xf32> to vector<8xf32>
    %20 = vector.shape_cast %19 : vector<8xf32> to vector<8x1xf32>
    %21 = vector.broadcast %20 : vector<8x1xf32> to vector<8x128xf32>
    %22 = arith.divf %18, %21 : vector<8x128xf32>
    %23 = vector.extract_strided_slice %22 {offsets = [0, 0], sizes = [8, 8], strides = [1, 1]} : vector<8x128xf32> to vector<8x8xf32>
    %c0_12 = arith.constant 0 : index
    %c0_13 = arith.constant 0 : index
    %24 = vector.load %arg6[%c0_12, %c0_13] : memref<8x8xf32, #tpu.memory_space<vmem>>, vector<8x8xf32>
    tpu.vector_store %arg6[%c0_12, %c0_13], %23 {strides = array<i32>} : memref<8x8xf32, #tpu.memory_space<vmem>>, vector<8x8xf32>,
    return
  }
  func.func @transform_0(%arg0: i32) -> (i32, i32) {
    %c0_i32 = arith.constant 0 : i32
    %c0_i32_0 = arith.constant 0 : i32
    return %arg0, %c0_i32 : i32, i32
  }
  func.func @transform_1(%arg0: i32) -> (i32, i32) {
    %c0_i32 = arith.constant 0 : i32
    %c0_i32_0 = arith.constant 0 : i32
    %c0_i32_1 = arith.constant 0 : i32
    return %c0_i32, %c0_i32_0 : i32, i32
  }
  func.func @transform_2(%arg0: i32) -> (i32, i32) {
    %c0_i32 = arith.constant 0 : i32
    %c0_i32_0 = arith.constant 0 : i32
    %c0_i32_1 = arith.constant 0 : i32
    return %c0_i32, %c0_i32_0 : i32, i32
  }
  func.func @transform_3(%arg0: i32) -> (i32, i32) {
    %c0_i32 = arith.constant 0 : i32
    %c0_i32_0 = arith.constant 0 : i32
    %c0_i32_1 = arith.constant 0 : i32
    return %c0_i32, %c0_i32_0 : i32, i32
  }
  func.func @transform_4(%arg0: i32) -> (i32, i32) {
    %c0_i32 = arith.constant 0 : i32
    %c0_i32_0 = arith.constant 0 : i32
    %c0_i32_1 = arith.constant 0 : i32
    return %c0_i32, %c0_i32_0 : i32, i32
  }
  func.func @transform_5(%arg0: i32) -> (i32, i32) {
    %c0_i32 = arith.constant 0 : i32
    %c0_i32_0 = arith.constant 0 : i32
    return %arg0, %c0_i32 : i32, i32
  }
}

</mosaic_0001>

<llo_original>
// kernel: tpu_custom_call.1
$region0: #{tpu_custom_call.1}
  #allocation0 [shape = 'u32[]', space=smem, size = 0x4, offset = 0x4, fixed_abs, tag = 'smem constant byte address 0x4 - core index']
  #allocation1 [shape = 'u32[144,128]{1,0:T(1,128)}', space=vmem, size = 0x12000, scoped, tag = 'internal scratch']
  %s0 = inlined_call_operand.hbm [shape: f32[8,32], index: 0, kind: input, shape index: {}]
  %s1 = inlined_call_operand.hbm [shape: bf16[32,128], index: 1, kind: input, shape index: {}]
  %s2 = inlined_call_operand.vmem [shape: f32[1,128], index: 2, kind: input, shape index: {}]
  %s3 = inlined_call_operand.hbm [shape: bf16[128,128], index: 3, kind: input, shape index: {}]
  %s4 = inlined_call_operand.vmem [shape: f32[1,128], index: 4, kind: input, shape index: {}]
  %s5 = inlined_call_operand.hbm [shape: f32[8,8], index: 5, kind: output, shape index: {}]
  %s6 = sld [smem:[#allocation0]]
  $region42: #{tpu_custom_call.1} parent=0
    _
  %s8 = ssub.s32 1, %s6
  %s9 = scalar_select 0, %s8, %s6
  $region1: #{tpu_custom_call.1} parent=0
    #allocation2 [shape = 'u8[4096]{0}', space=vmem, size = 0x1000, scoped, tag = 'input window, operand 0, single buffered']
    #allocation3 [shape = 's32[1]{0}', space=sflag, size = 0x4, scoped, tag = 'scoped memory for tpu_custom_call.1']
    #allocation4 [shape = 's32[1]{0}', space=sflag, size = 0x4, scoped, tag = 'scoped memory for tpu_custom_call.1']
    #allocation5 [shape = 'u8[8192]{0}', space=vmem, size = 0x2000, scoped, tag = 'input window, operand 1, single buffered']
    #allocation6 [shape = 's32[1]{0}', space=sflag, size = 0x4, scoped, tag = 'scoped memory for tpu_custom_call.1']
    #allocation7 [shape = 'u8[32768]{0}', space=vmem, size = 0x8000, scoped, tag = 'input window, operand 3, single buffered']
    #allocation8 [shape = 'u8[4096]{0}', space=vmem, size = 0x1000, scoped, tag = 'output window, operand 0, single buffered']
    %10 = vsyncpa [#allocation3], 0
    %11 = vsyncpa [#allocation6], 0
    %12 = vsyncpa [#allocation4], 0
    // Predicated region
    $region2: #{tpu_custom_call.1} parent=1 // pred_check
      _
    $region3: #{tpu_custom_call.1} parent=1 // pred_check_branch
      %14 = sbr.rel (0) target = $region5
    $region4: #{tpu_custom_call.1} parent=1 // pred_region
      %s16 = ssub.s32 128, 128
      %17 = vsyncadd [#allocation3], %s16
      %s19 = sshll.u32 [#allocation2], 4
      %s20 = int_to_ptr.vmem [resolvable:$true] %s19
      %22 = dma.hbm_to_vmem [thread:$0]  %s0, 128, %s20, [#allocation3]
    $region5: #{tpu_custom_call.1} parent=1 // pred_fallthru
      _
    // Predicated region
    $region6: #{tpu_custom_call.1} parent=1 // pred_check
      _
    $region7: #{tpu_custom_call.1} parent=1 // pred_check_branch
      %24 = sbr.rel (0) target = $region9
    $region8: #{tpu_custom_call.1} parent=1 // pred_region
      %s26 = ssub.s32 256, 256
      %27 = vsyncadd [#allocation6], %s26
      %s28 = sshll.u32 [#allocation5], 4
      %s29 = int_to_ptr.vmem [resolvable:$true] %s28
      %34 = dma.hbm_to_vmem [thread:$0]  %s1, 256, %s29, [#allocation6], 64, 64, 4
    $region9: #{tpu_custom_call.1} parent=1 // pred_fallthru
      _
    // Predicated region
    $region10: #{tpu_custom_call.1} parent=1 // pred_check
      _
    $region11: #{tpu_custom_call.1} parent=1 // pred_check_branch
      %36 = sbr.rel (0) target = $region13
    $region12: #{tpu_custom_call.1} parent=1 // pred_region
      _
    $region13: #{tpu_custom_call.1} parent=1 // pred_fallthru
      _
    // Predicated region
    $region14: #{tpu_custom_call.1} parent=1 // pred_check
      _
    $region15: #{tpu_custom_call.1} parent=1 // pred_check_branch
      %38 = sbr.rel (0) target = $region17
    $region16: #{tpu_custom_call.1} parent=1 // pred_region
      %s40 = ssub.s32 1024, 1024
      %41 = vsyncadd [#allocation6], %s40
      %s42 = sshll.u32 [#allocation7], 4
      %s43 = int_to_ptr.vmem [resolvable:$true] %s42
      %48 = dma.hbm_to_vmem [thread:$0]  %s3, 1024, %s43, [#allocation6], 64, 64, 4
    $region17: #{tpu_custom_call.1} parent=1 // pred_fallthru
      _
    // Predicated region
    $region18: #{tpu_custom_call.1} parent=1 // pred_check
      _
    $region19: #{tpu_custom_call.1} parent=1 // pred_check_branch
      %50 = sbr.rel (0) target = $region21
    $region20: #{tpu_custom_call.1} parent=1 // pred_region
      _
    $region21: #{tpu_custom_call.1} parent=1 // pred_fallthru
      _
    // Predicated region
    $region22: #{tpu_custom_call.1} parent=1 // pred_check
      _
    $region23: #{tpu_custom_call.1} parent=1 // pred_check_branch
      %52 = sbr.rel (0) target = $region25
    $region24: #{tpu_custom_call.1} parent=1 // pred_region
      %53 = dma.done [#allocation3], 128
    $region25: #{tpu_custom_call.1} parent=1 // pred_fallthru
      _
    // Predicated region
    $region26: #{tpu_custom_call.1} parent=1 // pred_check
      _
    $region27: #{tpu_custom_call.1} parent=1 // pred_check_branch
      %55 = sbr.rel (0) target = $region29
    $region28: #{tpu_custom_call.1} parent=1 // pred_region
      %56 = dma.done [#allocation6], 256
    $region29: #{tpu_custom_call.1} parent=1 // pred_fallthru
      _
    // Predicated region
    $region30: #{tpu_custom_call.1} parent=1 // pred_check
      _
    $region31: #{tpu_custom_call.1} parent=1 // pred_check_branch
      %58 = sbr.rel (0) target = $region33
    $region32: #{tpu_custom_call.1} parent=1 // pred_region
      %59 = dma.done [#allocation6], 1024
    $region33: #{tpu_custom_call.1} parent=1 // pred_fallthru
      _
    %v61 = vld [vmem:[#allocation2] sm:$0xff]
    %v62 = vpack.c.bf16 %v61, %v61
    %v63 = vld [vmem:[#allocation5] sm:$0xf]
    %v64 = vld [vmem:[#allocation5 + $0x4] sm:$0xf]
    %v65 = vld [vmem:[#allocation5 + $0x8] sm:$0xf]
    %v66 = vld [vmem:[#allocation5 + $0xc] sm:$0xf]
    %v67 = vld [vmem:[%s2] sm:$0x1]
    %v69 = vlaneseq
    %v70 = vshrl.u32 %v69, 7
    %v71 = vsub.s32 0, %v70
    %v72 = vrot.slane %v67, %v71
    %v78 = vunpack.c.l.b16 %v63
    %v79 = vunpack.c.l.b16 %v64
    %v80 = vunpack.c.l.b16 %v65
    %v81 = vunpack.c.l.b16 %v66
    %v82 = vpack.c.b16 %v79, %v78
    %v83 = vpack.c.b16 %v81, %v80
    %vm86 = vcmask 261120
    %v88 = vsel %vm86, %v62, 0
    %90 = vmatprep.subr.bf16.mxu0 0
    %91 = vmatpush1.bf16.msra.mxu0 0
    %92 = vmatprep.subr.bf16.mxu0 0
    %93 = vmatpush1.bf16.msra.mxu0 0
    %94 = vmatprep.subr.bf16.mxu0 0
    %95 = vmatpush1.bf16.msra.mxu0 0
    %96 = vmatprep.subr.bf16.mxu0 0
    %97 = vmatpush1.bf16.msra.mxu0 0
    %98 = vmatprep.subr.bf16.mxu0 0
    %99 = vmatpush1.bf16.msra.mxu0 0
    %100 = vmatprep.subr.bf16.mxu0 0
    %101 = vmatpush1.bf16.msra.mxu0 0
    %102 = vmatprep.subr.bf16.mxu0 0
    %103 = vmatpush1.bf16.msra.mxu0 %v83
    %104 = vmatprep.subr.bf16.mxu0 0
    %105 = vmatpush1.bf16.msra.mxu0 %v82
    %106 = vmatprep.subr.bf16.mxu0 0
    %107 = vmatpush2.bf16.msra.mxu0 0
    %108 = vmatprep.subr.bf16.mxu0 0
    %109 = vmatpush2.bf16.msra.mxu0 0
    %110 = vmatprep.subr.bf16.mxu0 0
    %111 = vmatpush2.bf16.msra.mxu0 0
    %112 = vmatprep.subr.bf16.mxu0 0
    %113 = vmatpush2.bf16.msra.mxu0 0
    %114 = vmatprep.subr.bf16.mxu0 0
    %115 = vmatpush2.bf16.msra.mxu0 0
    %116 = vmatprep.subr.bf16.mxu0 0
    %117 = vmatpush2.bf16.msra.mxu0 0
    %118 = vmatprep.subr.bf16.mxu0 0
    %119 = vmatpush2.bf16.msra.mxu0 0
    %120 = vmatprep.subr.bf16.mxu0 0
    %121 = vmatpush2.bf16.msra.mxu0 0
    %122 = vmatprep.mubr.bf16.mxu0 0
    %123 = vmatmul.mubr.bf16.gmra.mxu0 %v88
    %v124 = vpop.f32.mrf.mxu0
    %v125 = vadd.f32 %v72, %v124
    %v126 = vpop.f32.mrf.mxu0
    %v127 = vpop.f32.mrf.mxu0
    %v128 = vpop.f32.mrf.mxu0
    %129 = vdwg.mxu0
    %v130 = vtanh.pop %v125
    %v131 = vpack.c.bf16 %v130, %v130
    %v132 = vld [vmem:[#allocation7] sm:$0xf]
    %v133 = vld [vmem:[#allocation7 + $0x4] sm:$0xf]
    %v134 = vld [vmem:[#allocation7 + $0x8] sm:$0xf]
    %v135 = vld [vmem:[#allocation7 + $0xc] sm:$0xf]
    %v136 = vld [vmem:[#allocation7 + $0x10] sm:$0xf]
    %v137 = vld [vmem:[#allocation7 + $0x14] sm:$0xf]
    %v138 = vld [vmem:[#allocation7 + $0x18] sm:$0xf]
    %v139 = vld [vmem:[#allocation7 + $0x1c] sm:$0xf]
    %v140 = vld [vmem:[#allocation7 + $0x20] sm:$0xf]
    %v141 = vld [vmem:[#allocation7 + $0x24] sm:$0xf]
    %v142 = vld [vmem:[#allocation7 + $0x28] sm:$0xf]
    %v143 = vld [vmem:[#allocation7 + $0x2c] sm:$0xf]
    %v144 = vld [vmem:[#allocation7 + $0x30] sm:$0xf]
    %v145 = vld [vmem:[#allocation7 + $0x34] sm:$0xf]
    %v146 = vld [vmem:[#allocation7 + $0x38] sm:$0xf]
    %v147 = vld [vmem:[#allocation7 + $0x3c] sm:$0xf]
    %v148 = vld [vmem:[%s4] sm:$0x1]
    %v150 = vlaneseq
    %v151 = vshrl.u32 %v150, 7
    %v152 = vsub.s32 0, %v151
    %v153 = vrot.slane %v148, %v152
    %v171 = vunpack.c.l.b16 %v132
    %v172 = vunpack.c.l.b16 %v133
    %v173 = vunpack.c.l.b16 %v134
    %v174 = vunpack.c.l.b16 %v135
    %v175 = vunpack.c.l.b16 %v136
    %v176 = vunpack.c.l.b16 %v137
    %v177 = vunpack.c.l.b16 %v138
    %v178 = vunpack.c.l.b16 %v139
    %v179 = vunpack.c.l.b16 %v140
    %v180 = vunpack.c.l.b16 %v141
    %v181 = vunpack.c.l.b16 %v142
    %v182 = vunpack.c.l.b16 %v143
    %v183 = vunpack.c.l.b16 %v144
    %v184 = vunpack.c.l.b16 %v145
    %v185 = vunpack.c.l.b16 %v146
    %v186 = vunpack.c.l.b16 %v147
    %v187 = vpack.c.b16 %v172, %v171
    %v188 = vpack.c.b16 %v174, %v173
    %v189 = vpack.c.b16 %v176, %v175
    %v190 = vpack.c.b16 %v178, %v177
    %v191 = vpack.c.b16 %v180, %v179
    %v192 = vpack.c.b16 %v182, %v181
    %v193 = vpack.c.b16 %v184, %v183
    %v194 = vpack.c.b16 %v186, %v185
    %203 = vmatprep.subr.bf16.mxu0 0
    %204 = vmatpush1.bf16.msra.mxu0 %v194
    %205 = vmatprep.subr.bf16.mxu0 0
    %206 = vmatpush1.bf16.msra.mxu0 %v193
    %207 = vmatprep.subr.bf16.mxu0 0
    %208 = vmatpush1.bf16.msra.mxu0 %v192
    %209 = vmatprep.subr.bf16.mxu0 0
    %210 = vmatpush1.bf16.msra.mxu0 %v191
    %211 = vmatprep.subr.bf16.mxu0 0
    %212 = vmatpush1.bf16.msra.mxu0 %v190
    %213 = vmatprep.subr.bf16.mxu0 0
    %214 = vmatpush1.bf16.msra.mxu0 %v189
    %215 = vmatprep.subr.bf16.mxu0 0
    %216 = vmatpush1.bf16.msra.mxu0 %v188
    %217 = vmatprep.subr.bf16.mxu0 0
    %218 = vmatpush1.bf16.msra.mxu0 %v187
    %219 = vmatprep.subr.bf16.mxu0 0
    %220 = vmatpush2.bf16.msra.mxu0 0
    %221 = vmatprep.subr.bf16.mxu0 0
    %222 = vmatpush2.bf16.msra.mxu0 0
    %223 = vmatprep.subr.bf16.mxu0 0
    %224 = vmatpush2.bf16.msra.mxu0 0
    %225 = vmatprep.subr.bf16.mxu0 0
    %226 = vmatpush2.bf16.msra.mxu0 0
    %227 = vmatprep.subr.bf16.mxu0 0
    %228 = vmatpush2.bf16.msra.mxu0 0
    %229 = vmatprep.subr.bf16.mxu0 0
    %230 = vmatpush2.bf16.msra.mxu0 0
    %231 = vmatprep.subr.bf16.mxu0 0
    %232 = vmatpush2.bf16.msra.mxu0 0
    %233 = vmatprep.subr.bf16.mxu0 0
    %234 = vmatpush2.bf16.msra.mxu0 0
    %235 = vmatprep.mubr.bf16.mxu0 0
    %236 = vmatmul.mubr.bf16.gmra.mxu0 %v131
    %v237 = vpop.f32.mrf.mxu0
    %v238 = vadd.f32 %v153, %v237
    %v239 = vpop.f32.mrf.mxu0
    %v240 = vpop.f32.mrf.mxu0
    %v241 = vpop.f32.mrf.mxu0
    %242 = vdwg.mxu0
    %243 = vmax.xlane.f32.xlu0 %v238
    %v244 = vpop.xlane.xlu0 %243
    %v245 = vsub.f32 %v238, %v244
    %v246 = vmul.f32 %v245, 1.442695
    %v247 = vpow.pop %v246
    %248 = vadd.xlane.f32.xlu0 %v247
    %v249 = vpop.xlane.xlu0 %248
    %v250 = vrcp.pop %v249
    %v251 = vmul.f32 %v247, %v250
    %vm252 = vcmask 64512
    %253 = vst.msk [vmem:[#allocation8] sm:$0xff] %vm252, %v251
    // Predicated region
    $region34: #{tpu_custom_call.1} parent=1 // pred_check
      _
    $region35: #{tpu_custom_call.1} parent=1 // pred_check_branch
      %255 = sbr.rel (0) target = $region37
    $region36: #{tpu_custom_call.1} parent=1 // pred_region
      %s257 = ssub.s32 128, 128
      %258 = vsyncadd [#allocation4], %s257
      %s260 = sshll.u32 [#allocation8], 4
      %s261 = int_to_ptr.vmem [resolvable:$true] %s260
      %263 = dma.vmem_to_hbm [thread:$0]  %s261, 128, %s5, [#allocation4]
    $region37: #{tpu_custom_call.1} parent=1 // pred_fallthru
      _
    // Predicated region
    $region38: #{tpu_custom_call.1} parent=1 // pred_check
      _
    $region39: #{tpu_custom_call.1} parent=1 // pred_check_branch
      %265 = sbr.rel (0) target = $region41
    $region40: #{tpu_custom_call.1} parent=1 // pred_region
      %266 = dma.done [#allocation4], 128
    $region41: #{tpu_custom_call.1} parent=1 // pred_fallthru
      _
    %267 = vsyncpa [#allocation3], 1
    %268 = vsyncpa [#allocation6], 1
    %269 = vsyncpa [#allocation4], 1

</llo_original>
